<compile_context>
chip_gen: v5e
topology: v5e:2x2
jax: 0.10.0
libtpu: 0.0.40
codegen_flags: <defaults>
</compile_context>

<pallas_src>
import jax
import jax.numpy as jnp
from jax.experimental import pallas as pl
from jax.experimental.pallas import tpu as pltpu

_LANE = 128


def _round_up(x, m):
    return ((x + m - 1) // m) * m


def _mlp_value_kernel(xT_ref, w1T_ref, b1_ref, w2T_ref, b2_ref, w3_ref, b3_ref,
                      out_ref):
    """One batch tile, batch on lanes: (obs_dim, tm) -> (1, tm)."""
    xT = xT_ref[...]                                        # (obs_dim, tm)
    # Hidden layers on the MXU (f32 accumulation), tanh on the EUP.
    h1 = jnp.tanh(
        jnp.dot(w1T_ref[...], xT, preferred_element_type=jnp.float32)
        + b1_ref[...]
    )                                                       # (h1, tm) f32
    h2 = jnp.tanh(
        jnp.dot(w2T_ref[...], h1.astype(w2T_ref.dtype),
                preferred_element_type=jnp.float32)
        + b2_ref[...]
    )                                                       # (h2, tm) f32
    # Final layer has out_features == 1: instead of a wasted N=1 MXU pass,
    # do a VPU broadcast-multiply + sublane reduction straight into the
    # lane-dense (1, tm) output block.
    out_ref[...] = (
        jnp.sum(h2 * w3_ref[...], axis=0, keepdims=True) + b3_ref[...]
    )


def mlp_value_forward(obs, params, *, tm=4096, megacore_split=2, use_bf16=False):
    """obs: (B, obs_dim) f32.  params: dict of W1,b1,W2,b2,W3,b3.  Returns (B, 1)."""
    B, obs_dim = obs.shape
    w1, b1 = params["W1"], params["b1"]
    w2, b2 = params["W2"], params["b2"]
    w3, b3 = params["W3"], params["b3"]
    h1 = w1.shape[1]
    h2 = w2.shape[1]

    # Lane-dense layout: the batch dimension sits on the last (lane) axis of
    # every kernel operand.  Weight transposes / bias reshapes are tiny,
    # one-off host-side XLA ops.
    obs_t = obs.T                        # (obs_dim, B)
    w1_t = w1.T                          # (h1, obs_dim)
    w2_t = w2.T                          # (h2, h1)
    b1_c = b1.reshape(h1, 1)
    b2_c = b2.reshape(h2, 1)
    w3_c = w3.reshape(h2, 1)
    b3_c = b3.reshape(1, 1)

    if use_bf16:
        # TODO(synk): bf16 MXU path trades the 1e-5 f32 tolerance for ~3x
        # fewer MXU passes; keep opt-in.
        obs_t = obs_t.astype(jnp.bfloat16)
        w1_t = w1_t.astype(jnp.bfloat16)
        w2_t = w2_t.astype(jnp.bfloat16)

    # Column (batch) tile: multiples of 128 lanes for big batches; a single
    # whole-batch block (== full array dims, no alignment needed) for small
    # ones.  Target >= `megacore_split` grid steps so v7x's two TensorCores
    # both get work; the extra grid step is harmless on v5e/v6e.
    if B <= 2 * _LANE:
        tm_eff = B
    else:
        target = pl.cdiv(B, max(megacore_split, 1))
        tm_eff = min(tm, _round_up(target, _LANE), _round_up(B, _LANE))
    grid = (pl.cdiv(B, tm_eff),)

    # obs / out are streamed per grid step; weights & biases pin one block
    # (index_map always (0, 0)) so they are fetched once and stay in VMEM.
    resident = lambda shape: pl.BlockSpec(shape, lambda i: (0, 0))
    in_specs = [
        pl.BlockSpec((obs_dim, tm_eff), lambda i: (0, i)),  # obs^T tile
        resident((h1, obs_dim)),                            # W1^T
        resident((h1, 1)),                                  # b1 (column)
        resident((h2, h1)),                                 # W2^T
        resident((h2, 1)),                                  # b2 (column)
        resident((h2, 1)),                                  # W3 (column)
        resident((1, 1)),                                   # b3
    ]
    out_spec = pl.BlockSpec((1, tm_eff), lambda i: (0, i))

    cost = pl.CostEstimate(
        flops=2 * B * (obs_dim * h1 + h1 * h2 + h2),
        transcendentals=B * (h1 + h2),
        bytes_accessed=4 * (B * obs_dim + B + obs_dim * h1 + h1 * h2
                            + h1 + 2 * h2 + 1),
    )

    out = pl.pallas_call(
        _mlp_value_kernel,
        out_shape=jax.ShapeDtypeStruct((1, B), jnp.float32),
        grid=grid,
        in_specs=in_specs,
        out_specs=out_spec,
        compiler_params=pltpu.CompilerParams(
            # Batch tiles are independent -> shard across TCs on v7x megacore.
            dimension_semantics=("parallel",),
            # Tiny working set (<4 MiB even at tm=4096); explicit cap keeps
            # tiling honest on v7x (64 MiB physical / 32 MiB scoped default)
            # as well as v5e/v6e (128 MiB physical).
            vmem_limit_bytes=32 * 1024 * 1024,
        ),
        cost_estimate=cost,
    )(obs_t, w1_t, b1_c, w2_t, b2_c, w3_c, b3_c)

    # (1, B) -> (B, 1): same linear layout, free reshape.
    return out.reshape(B, 1)


def init_params(key, obs_dim, hidden_sizes):
    """Deterministic init mimicking nn.Linear default (uniform(-1/sqrt(fan_in), ...))."""
    sizes = [obs_dim] + list(hidden_sizes) + [1]
    params = {}
    for i in range(len(sizes) - 1):
        fan_in, fan_out = sizes[i], sizes[i + 1]
        key, kw, kb = jax.random.split(key, 3)
        bound = 1.0 / jnp.sqrt(jnp.float32(fan_in))
        params[f"W{i + 1}"] = jax.random.uniform(
            kw, (fan_in, fan_out), jnp.float32, -bound, bound
        )
        params[f"b{i + 1}"] = jax.random.uniform(
            kb, (1, fan_out), jnp.float32, -bound, bound
        )
    return params


def reference_forward(obs, params):
    h = jnp.tanh(obs @ params["W1"] + params["b1"])
    h = jnp.tanh(h @ params["W2"] + params["b2"])
    return h @ params["W3"] + params["b3"]


if __name__ == "__main__":
    key = jax.random.PRNGKey(0)
    obs_dim, hidden_sizes = 16, [64, 64]

    k_obs, k_params, k_small, k_ragged = jax.random.split(key, 4)
    params = init_params(k_params, obs_dim, hidden_sizes)

    # Batched path: exercises the grid (two lane-dense 512-column tiles,
    # weights resident, both v7x TensorCores busy).
    B = 1024
    obs = jax.random.normal(k_obs, (B, obs_dim), dtype=jnp.float32)
    v = jax.block_until_ready(mlp_value_forward(obs, params))
    v_ref = reference_forward(obs, params)
    assert v.shape == (B, 1)
    assert jnp.allclose(v, v_ref, atol=1e-5, rtol=1e-5), "Pallas output mismatch (B=1024)"

    # Tiny-batch path (RL rollout style): single whole-batch tile, grid of 1.
    obs_small = jax.random.normal(k_small, (8, obs_dim), dtype=jnp.float32)
    v_small = jax.block_until_ready(mlp_value_forward(obs_small, params))
    v_small_ref = reference_forward(obs_small, params)
    assert v_small.shape == (8, 1)
    assert jnp.allclose(v_small, v_small_ref, atol=1e-5, rtol=1e-5), (
        "Pallas output mismatch (B=8)"
    )

    # Ragged batch (not a multiple of 8/128): single full-array block; checks
    # no padding garbage leaks into valid rows.
    obs_rag = jax.random.normal(k_ragged, (37, obs_dim), dtype=jnp.float32)
    v_rag = jax.block_until_ready(mlp_value_forward(obs_rag, params))
    v_rag_ref = reference_forward(obs_rag, params)
    assert v_rag.shape == (37, 1)
    assert jnp.allclose(v_rag, v_rag_ref, atol=1e-5, rtol=1e-5), (
        "Pallas output mismatch (B=37)"
    )

    print("KERNEL_OK")
</pallas_src>

<mosaic_0001>
module attributes {stable_mosaic.version = 11 : i64} {
  func.func @_mlp_value_kernel(%arg0: i32, %arg1: memref<16x512xf32, #tpu.memory_space<vmem>>, %arg2: memref<64x16xf32, #tpu.memory_space<vmem>>, %arg3: memref<64x1xf32, #tpu.memory_space<vmem>>, %arg4: memref<64x64xf32, #tpu.memory_space<vmem>>, %arg5: memref<64x1xf32, #tpu.memory_space<vmem>>, %arg6: memref<64x1xf32, #tpu.memory_space<vmem>>, %arg7: memref<1x1xf32, #tpu.memory_space<vmem>>, %arg8: memref<1x512xf32, #tpu.memory_space<vmem>>) attributes {dimension_semantics = [#tpu.dimension_semantics<parallel>], iteration_bounds = array<i64: 2>, scalar_prefetch = 0 : i64, scratch_operands = 0 : i64, tpu.core_type = #tpu.core_type<tc>, window_params = [{transform_indices = @transform_0, window_bounds = array<i64: 16, 512>}, {pipeline_mode = #tpu.pipeline_mode<synchronous>, transform_indices = @transform_1, window_bounds = array<i64: 64, 16>}, {pipeline_mode = #tpu.pipeline_mode<synchronous>, transform_indices = @transform_2, window_bounds = array<i64: 64, 1>}, {pipeline_mode = #tpu.pipeline_mode<synchronous>, transform_indices = @transform_3, window_bounds = array<i64: 64, 64>}, {pipeline_mode = #tpu.pipeline_mode<synchronous>, transform_indices = @transform_4, window_bounds = array<i64: 64, 1>}, {pipeline_mode = #tpu.pipeline_mode<synchronous>, transform_indices = @transform_5, window_bounds = array<i64: 64, 1>}, {pipeline_mode = #tpu.pipeline_mode<synchronous>, transform_indices = @transform_6, window_bounds = array<i64: 1, 1>}, {transform_indices = @transform_7, window_bounds = array<i64: 1, 512>}]} {
    %c0 = arith.constant 0 : index
    %c0_0 = arith.constant 0 : index
    %0 = vector.load %arg1[%c0, %c0_0] : memref<16x512xf32, #tpu.memory_space<vmem>>, vector<16x512xf32>
    %c0_1 = arith.constant 0 : index
    %c0_2 = arith.constant 0 : index
    %1 = vector.load %arg2[%c0_1, %c0_2] : memref<64x16xf32, #tpu.memory_space<vmem>>, vector<64x16xf32>
    %cst = arith.constant dense<0.000000e+00> : vector<64x512xf32>
    %2 = tpu.matmul %1, %0, %cst {dimension_numbers = #tpu.dot_dimension_numbers<[1], [0], [0], [1], [0, 0, 1, 1], [], []>} : vector<64x16xf32>, vector<16x512xf32>, vector<64x512xf32> -> vector<64x512xf32>
    %c0_3 = arith.constant 0 : index
    %c0_4 = arith.constant 0 : index
    %3 = vector.load %arg3[%c0_3, %c0_4] : memref<64x1xf32, #tpu.memory_space<vmem>>, vector<64x1xf32>
    %4 = vector.broadcast %3 : vector<64x1xf32> to vector<64x512xf32>
    %5 = arith.addf %2, %4 : vector<64x512xf32>
    %6 = math.tanh %5 : vector<64x512xf32>
    %c0_5 = arith.constant 0 : index
    %c0_6 = arith.constant 0 : index
    %7 = vector.load %arg4[%c0_5, %c0_6] : memref<64x64xf32, #tpu.memory_space<vmem>>, vector<64x64xf32>
    %cst_7 = arith.constant dense<0.000000e+00> : vector<64x512xf32>
    %8 = tpu.matmul %7, %6, %cst_7 {dimension_numbers = #tpu.dot_dimension_numbers<[1], [0], [0], [1], [0, 0, 1, 1], [], []>} : vector<64x64xf32>, vector<64x512xf32>, vector<64x512xf32> -> vector<64x512xf32>
    %c0_8 = arith.constant 0 : index
    %c0_9 = arith.constant 0 : index
    %9 = vector.load %arg5[%c0_8, %c0_9] : memref<64x1xf32, #tpu.memory_space<vmem>>, vector<64x1xf32>
    %10 = vector.broadcast %9 : vector<64x1xf32> to vector<64x512xf32>
    %11 = arith.addf %8, %10 : vector<64x512xf32>
    %12 = math.tanh %11 : vector<64x512xf32>
    %c0_10 = arith.constant 0 : index
    %c0_11 = arith.constant 0 : index
    %13 = vector.load %arg6[%c0_10, %c0_11] : memref<64x1xf32, #tpu.memory_space<vmem>>, vector<64x1xf32>
    %14 = vector.broadcast %13 : vector<64x1xf32> to vector<64x512xf32>
    %15 = arith.mulf %12, %14 : vector<64x512xf32>
    %cst_12 = arith.constant dense<0.000000e+00> : vector<512xf32>
    %16 = vector.multi_reduction <add>, %15, %cst_12 [0] : vector<64x512xf32> to vector<512xf32>
    %17 = vector.shape_cast %16 : vector<512xf32> to vector<1x512xf32>
    %c0_13 = arith.constant 0 : index
    %c0_14 = arith.constant 0 : index
    %18 = vector.load %arg7[%c0_13, %c0_14] : memref<1x1xf32, #tpu.memory_space<vmem>>, vector<1x1xf32>
    %19 = vector.broadcast %18 : vector<1x1xf32> to vector<1x512xf32>
    %20 = arith.addf %17, %19 : vector<1x512xf32>
    %c0_15 = arith.constant 0 : index
    %c0_16 = arith.constant 0 : index
    %21 = vector.load %arg8[%c0_15, %c0_16] : memref<1x512xf32, #tpu.memory_space<vmem>>, vector<1x512xf32>
    tpu.vector_store %arg8[%c0_15, %c0_16], %20 {strides = array<i32>} : memref<1x512xf32, #tpu.memory_space<vmem>>, vector<1x512xf32>,
    return
  }
  func.func @transform_0(%arg0: i32) -> (i32, i32) {
    %c0_i32 = arith.constant 0 : i32
    %c0_i32_0 = arith.constant 0 : i32
    return %c0_i32, %arg0 : i32, i32
  }
  func.func @transform_1(%arg0: i32) -> (i32, i32) {
    %c0_i32 = arith.constant 0 : i32
    %c0_i32_0 = arith.constant 0 : i32
    %c0_i32_1 = arith.constant 0 : i32
    return %c0_i32, %c0_i32_0 : i32, i32
  }
  func.func @transform_2(%arg0: i32) -> (i32, i32) {
    %c0_i32 = arith.constant 0 : i32
    %c0_i32_0 = arith.constant 0 : i32
    %c0_i32_1 = arith.constant 0 : i32
    return %c0_i32, %c0_i32_0 : i32, i32
  }
  func.func @transform_3(%arg0: i32) -> (i32, i32) {
    %c0_i32 = arith.constant 0 : i32
    %c0_i32_0 = arith.constant 0 : i32
    %c0_i32_1 = arith.constant 0 : i32
    return %c0_i32, %c0_i32_0 : i32, i32
  }
  func.func @transform_4(%arg0: i32) -> (i32, i32) {
    %c0_i32 = arith.constant 0 : i32
    %c0_i32_0 = arith.constant 0 : i32
    %c0_i32_1 = arith.constant 0 : i32
    return %c0_i32, %c0_i32_0 : i32, i32
  }
  func.func @transform_5(%arg0: i32) -> (i32, i32) {
    %c0_i32 = arith.constant 0 : i32
    %c0_i32_0 = arith.constant 0 : i32
    %c0_i32_1 = arith.constant 0 : i32
    return %c0_i32, %c0_i32_0 : i32, i32
  }
  func.func @transform_6(%arg0: i32) -> (i32, i32) {
    %c0_i32 = arith.constant 0 : i32
    %c0_i32_0 = arith.constant 0 : i32
    %c0_i32_1 = arith.constant 0 : i32
    return %c0_i32, %c0_i32_0 : i32, i32
  }
  func.func @transform_7(%arg0: i32) -> (i32, i32) {
    %c0_i32 = arith.constant 0 : i32
    %c0_i32_0 = arith.constant 0 : i32
    return %c0_i32, %arg0 : i32, i32
  }
}

</mosaic_0001>

<llo_original>
// kernel: tpu_custom_call.1
$region0: #{tpu_custom_call.1}
  #allocation0 [shape = 'u32[]', space=smem, size = 0x4, offset = 0x4, fixed_abs, tag = 'smem constant byte address 0x4 - core index']
  #allocation1 [shape = 'u32[72,128]{1,0:T(1,128)}', space=vmem, size = 0x9000, scoped, tag = 'internal scratch']
  #allocation2 [shape = 'f32[1,1]{1,0:T(1,128)S(1)}', space=vmem, size = 0x200, scoped, tag = 'scoped memory for tpu_custom_call.1']
  %s0 = inlined_call_operand.vmem [shape: f32[16,1024], index: 0, kind: input, shape index: {}]
  %s1 = inlined_call_operand.vmem [shape: f32[64,16], index: 1, kind: input, shape index: {}]
  %s2 = inlined_call_operand.vmem [shape: f32[64,1], index: 2, kind: input, shape index: {}]
  %s3 = inlined_call_operand.vmem [shape: f32[64,64], index: 3, kind: input, shape index: {}]
  %s4 = inlined_call_operand.vmem [shape: f32[64,1], index: 4, kind: input, shape index: {}]
  %s5 = inlined_call_operand.vmem [shape: f32[64,1], index: 5, kind: input, shape index: {}]
  %s6 = inlined_call_operand.<no memory space> [shape: f32[1,1], index: 6, kind: input, shape index: {}]
  %s7 = inlined_call_operand.hbm [shape: f32[1,1024], index: 7, kind: output, shape index: {}]
  %s8 = sld [smem:[#allocation0]]
  $region84: #{tpu_custom_call.1} parent=0
    _
  %s10 = ssub.s32 1, %s8
  %s11 = scalar_select 0, %s10, %s8
  %v12 = vstv %s6
  %13 = vst [vmem:[#allocation2] sm:$0x1] %v12
  $region1: #{tpu_custom_call.1} parent=0
    #allocation3 [shape = 'u8[65536]{0}', space=vmem, size = 0x10000, scoped, tag = 'input window, operand 0']
    #allocation4 [shape = 'u8[4096]{0}', space=vmem, size = 0x1000, scoped, tag = 'output window, operand 0']
    #allocation5 [shape = 's32[2]{0}', space=sflag, size = 0x8, scoped, tag = 'scoped memory for tpu_custom_call.1']
    %14 = vsyncpa [#allocation5], 0
    %s15 = scalar_lea.sflag [#allocation5], 1
    %16 = vsyncpa %s15, 0
    loop: start=0, step=1, limit=4
    $region2: #{tpu_custom_call.1} parent=1 // loop_pre_header
      _
    $region3: #{tpu_custom_call.1} parent=1 // loop_header
      %s18 = sphi 0, %s22
      %p19 = scmp.ge.s32.totalorder %s18, 4
      %s28 = sphi 0, %s30
      %s31 = sphi 0, %s28
      %s32 = sphi 0, %s31
      %s48 = sphi 0, %s32
      %s52 = sphi 0, %s52
      %s54 = sphi 0, %s52
      %s55 = sphi 0, %s54
      %s69 = sphi 0, %s55
      %s73 = sphi 0, %s73
      %s75 = sphi 0, %s73
      %s76 = sphi 0, %s75
      %s90 = sphi 0, %s76
      %s94 = sphi 0, %s94
      %s96 = sphi 0, %s94
      %s97 = sphi 0, %s96
      %s111 = sphi 0, %s97
      %s115 = sphi 0, %s115
      %s117 = sphi 0, %s115
      %s118 = sphi 0, %s117
      %s132 = sphi 0, %s118
      %s136 = sphi 0, %s136
      %s138 = sphi 0, %s136
      %s139 = sphi 0, %s138
      %s153 = sphi 0, %s139
      %s157 = sphi 0, %s157
      %s159 = sphi 0, %s157
      %s160 = sphi 0, %s159
      %s174 = sphi 0, %s160
      %s180 = sphi 0, %s182
      %s183 = sphi 0, %s180
      %s184 = sphi 0, %s183
      %s200 = sphi 0, %s184
    $region4: #{tpu_custom_call.1} parent=1 // loop_header_branch
      %21 = sbr.rel (%p19) target = $region8
    $region5: #{tpu_custom_call.1} parent=1 // loop_body
      %s23 = ssub.s32 %s18, 1
      %s24 = ssub.s32 %s18, 2
      %s25 = sadd.s32 %s18, 1
      %s26 = ssub.s32 %s18, %s25
      %p27 = scmp.eq.s32.totalorder %s26, 0
      %s29 = sadd.s32 %s28, 1
      %s30 = scalar_select %p27, %s28, %s29
      %p33 = pneg %p27
      %p34 = scmp.eq.s32.totalorder %s18, 1
      %p35 = por %p33, %p34
      %p36 = scmp.ne.s32.totalorder %s28, %s31
      %p37 = scmp.eq.s32.totalorder %s18, 0
      %p38 = por %p36, %p37
      %p39 = scmp.ne.s32.totalorder %s28, %s31
      %p40 = scmp.eq.s32.totalorder %s23, 1
      %p41 = por %p39, %p40
      %p42 = scmp.ne.s32.totalorder %s31, %s32
      %p43 = scmp.eq.s32.totalorder %s23, 0
      %p44 = por %p42, %p43
      %p45 = scmp.ne.s32.totalorder %s31, %s32
      %p46 = scmp.eq.s32.totalorder %s24, 1
      %p47 = por %p45, %p46
      %p49 = scmp.ne.s32.totalorder %s32, %s48
      %p50 = scmp.eq.s32.totalorder %s24, 0
      %p51 = por %p49, %p50
      %s53 = sadd.s32 %s52, 1
      %p56 = scmp.eq.s32.totalorder %s18, 1
      %p57 = scmp.ne.s32.totalorder %s52, %s54
      %p58 = scmp.eq.s32.totalorder %s18, 0
      %p59 = por %p57, %p58
      %p60 = scmp.ne.s32.totalorder %s52, %s54
      %p61 = scmp.eq.s32.totalorder %s23, 1
      %p62 = por %p60, %p61
      %p63 = scmp.ne.s32.totalorder %s54, %s55
      %p64 = scmp.eq.s32.totalorder %s23, 0
      %p65 = por %p63, %p64
      %p66 = scmp.ne.s32.totalorder %s54, %s55
      %p67 = scmp.eq.s32.totalorder %s24, 1
      %p68 = por %p66, %p67
      %p70 = scmp.ne.s32.totalorder %s55, %s69
      %p71 = scmp.eq.s32.totalorder %s24, 0
      %p72 = por %p70, %p71
      %s74 = sadd.s32 %s73, 1
      %p77 = scmp.eq.s32.totalorder %s18, 1
      %p78 = scmp.ne.s32.totalorder %s73, %s75
      %p79 = scmp.eq.s32.totalorder %s18, 0
      %p80 = por %p78, %p79
      %p81 = scmp.ne.s32.totalorder %s73, %s75
      %p82 = scmp.eq.s32.totalorder %s23, 1
      %p83 = por %p81, %p82
      %p84 = scmp.ne.s32.totalorder %s75, %s76
      %p85 = scmp.eq.s32.totalorder %s23, 0
      %p86 = por %p84, %p85
      %p87 = scmp.ne.s32.totalorder %s75, %s76
      %p88 = scmp.eq.s32.totalorder %s24, 1
      %p89 = por %p87, %p88
      %p91 = scmp.ne.s32.totalorder %s76, %s90
      %p92 = scmp.eq.s32.totalorder %s24, 0
      %p93 = por %p91, %p92
      %s95 = sadd.s32 %s94, 1
      %p98 = scmp.eq.s32.totalorder %s18, 1
      %p99 = scmp.ne.s32.totalorder %s94, %s96
      %p100 = scmp.eq.s32.totalorder %s18, 0
      %p101 = por %p99, %p100
      %p102 = scmp.ne.s32.totalorder %s94, %s96
      %p103 = scmp.eq.s32.totalorder %s23, 1
      %p104 = por %p102, %p103
      %p105 = scmp.ne.s32.totalorder %s96, %s97
      %p106 = scmp.eq.s32.totalorder %s23, 0
      %p107 = por %p105, %p106
      %p108 = scmp.ne.s32.totalorder %s96, %s97
      %p109 = scmp.eq.s32.totalorder %s24, 1
      %p110 = por %p108, %p109
      %p112 = scmp.ne.s32.totalorder %s97, %s111
      %p113 = scmp.eq.s32.totalorder %s24, 0
      %p114 = por %p112, %p113
      %s116 = sadd.s32 %s115, 1
      %p119 = scmp.eq.s32.totalorder %s18, 1
      %p120 = scmp.ne.s32.totalorder %s115, %s117
      %p121 = scmp.eq.s32.totalorder %s18, 0
      %p122 = por %p120, %p121
      %p123 = scmp.ne.s32.totalorder %s115, %s117
      %p124 = scmp.eq.s32.totalorder %s23, 1
      %p125 = por %p123, %p124
      %p126 = scmp.ne.s32.totalorder %s117, %s118
      %p127 = scmp.eq.s32.totalorder %s23, 0
      %p128 = por %p126, %p127
      %p129 = scmp.ne.s32.totalorder %s117, %s118
      %p130 = scmp.eq.s32.totalorder %s24, 1
      %p131 = por %p129, %p130
      %p133 = scmp.ne.s32.totalorder %s118, %s132
      %p134 = scmp.eq.s32.totalorder %s24, 0
      %p135 = por %p133, %p134
      %s137 = sadd.s32 %s136, 1
      %p140 = scmp.eq.s32.totalorder %s18, 1
      %p141 = scmp.ne.s32.totalorder %s136, %s138
      %p142 = scmp.eq.s32.totalorder %s18, 0
      %p143 = por %p141, %p142
      %p144 = scmp.ne.s32.totalorder %s136, %s138
      %p145 = scmp.eq.s32.totalorder %s23, 1
      %p146 = por %p144, %p145
      %p147 = scmp.ne.s32.totalorder %s138, %s139
      %p148 = scmp.eq.s32.totalorder %s23, 0
      %p149 = por %p147, %p148
      %p150 = scmp.ne.s32.totalorder %s138, %s139
      %p151 = scmp.eq.s32.totalorder %s24, 1
      %p152 = por %p150, %p151
      %p154 = scmp.ne.s32.totalorder %s139, %s153
      %p155 = scmp.eq.s32.totalorder %s24, 0
      %p156 = por %p154, %p155
      %s158 = sadd.s32 %s157, 1
      %p161 = scmp.eq.s32.totalorder %s18, 1
      %p162 = scmp.ne.s32.totalorder %s157, %s159
      %p163 = scmp.eq.s32.totalorder %s18, 0
      %p164 = por %p162, %p163
      %p165 = scmp.ne.s32.totalorder %s157, %s159
      %p166 = scmp.eq.s32.totalorder %s23, 1
      %p167 = por %p165, %p166
      %p168 = scmp.ne.s32.totalorder %s159, %s160
      %p169 = scmp.eq.s32.totalorder %s23, 0
      %p170 = por %p168, %p169
      %p171 = scmp.ne.s32.totalorder %s159, %s160
      %p172 = scmp.eq.s32.totalorder %s24, 1
      %p173 = por %p171, %p172
      %p175 = scmp.ne.s32.totalorder %s160, %s174
      %p176 = scmp.eq.s32.totalorder %s24, 0
      %p177 = por %p175, %p176
      %s178 = ssub.s32 %s18, %s25
      %p179 = scmp.eq.s32.totalorder %s178, 0
      %s181 = sadd.s32 %s180, 1
      %s182 = scalar_select %p179, %s180, %s181
      %p185 = pneg %p179
      %p186 = scmp.eq.s32.totalorder %s18, 1
      %p187 = por %p185, %p186
      %p188 = scmp.ne.s32.totalorder %s180, %s183
      %p189 = scmp.eq.s32.totalorder %s18, 0
      %p190 = por %p188, %p189
      %p191 = scmp.ne.s32.totalorder %s180, %s183
      %p192 = scmp.eq.s32.totalorder %s23, 1
      %p193 = por %p191, %p192
      %p194 = scmp.ne.s32.totalorder %s183, %s184
      %p195 = scmp.eq.s32.totalorder %s23, 0
      %p196 = por %p194, %p195
      %p197 = scmp.ne.s32.totalorder %s183, %s184
      %p198 = scmp.eq.s32.totalorder %s24, 1
      %p199 = por %p197, %p198
      %p201 = scmp.ne.s32.totalorder %s184, %s200
      %p202 = scmp.eq.s32.totalorder %s24, 0
      %p203 = por %p201, %p202
      %p204 = scmp.le.s32.totalorder 1, %s18
      %p205 = scmp.lt.s32.totalorder %s18, 3
      %p206 = pnand %p204, %p205
      %p207 = pneg %p206
      // Predicated region
      $region9: #{tpu_custom_call.1} parent=5 // pred_check
        _
      $region10: #{tpu_custom_call.1} parent=5 // pred_check_branch
        %209 = sbr.rel (%p206) target = $region12
      $region11: #{tpu_custom_call.1} parent=5 // pred_region
        %s210 = ssub.s32 %s18, 1
        // Predicated region
        $region13: #{tpu_custom_call.1} parent=11 // pred_check
          %p211 = pneg %p65
        $region14: #{tpu_custom_call.1} parent=11 // pred_check_branch
          %213 = sbr.rel (%p211) target = $region16
        $region15: #{tpu_custom_call.1} parent=11 // pred_region
          _
        $region16: #{tpu_custom_call.1} parent=11 // pred_fallthru
          _
        // Predicated region
        $region17: #{tpu_custom_call.1} parent=11 // pred_check
          %p214 = pneg %p86
        $region18: #{tpu_custom_call.1} parent=11 // pred_check_branch
          %216 = sbr.rel (%p214) target = $region20
        $region19: #{tpu_custom_call.1} parent=11 // pred_region
          _
        $region20: #{tpu_custom_call.1} parent=11 // pred_fallthru
          _
        // Predicated region
        $region21: #{tpu_custom_call.1} parent=11 // pred_check
          %p217 = pneg %p107
        $region22: #{tpu_custom_call.1} parent=11 // pred_check_branch
          %219 = sbr.rel (%p217) target = $region24
        $region23: #{tpu_custom_call.1} parent=11 // pred_region
          _
        $region24: #{tpu_custom_call.1} parent=11 // pred_fallthru
          _
        // Predicated region
        $region25: #{tpu_custom_call.1} parent=11 // pred_check
          %p220 = pneg %p128
        $region26: #{tpu_custom_call.1} parent=11 // pred_check_branch
          %222 = sbr.rel (%p220) target = $region28
        $region27: #{tpu_custom_call.1} parent=11 // pred_region
          _
        $region28: #{tpu_custom_call.1} parent=11 // pred_fallthru
          _
        // Predicated region
        $region29: #{tpu_custom_call.1} parent=11 // pred_check
          %p223 = pneg %p149
        $region30: #{tpu_custom_call.1} parent=11 // pred_check_branch
          %225 = sbr.rel (%p223) target = $region32
        $region31: #{tpu_custom_call.1} parent=11 // pred_region
          _
        $region32: #{tpu_custom_call.1} parent=11 // pred_fallthru
          _
        // Predicated region
        $region33: #{tpu_custom_call.1} parent=11 // pred_check
          %p226 = pneg %p170
        $region34: #{tpu_custom_call.1} parent=11 // pred_check_branch
          %228 = sbr.rel (%p226) target = $region36
        $region35: #{tpu_custom_call.1} parent=11 // pred_region
          _
        $region36: #{tpu_custom_call.1} parent=11 // pred_fallthru
          _
      $region12: #{tpu_custom_call.1} parent=5 // pred_fallthru
        _
      %p229 = scmp.lt.s32.totalorder %s18, 2
      // Predicated region
      $region37: #{tpu_custom_call.1} parent=5 // pred_check
        %p230 = pneg %p229
      $region38: #{tpu_custom_call.1} parent=5 // pred_check_branch
        %232 = sbr.rel (%p230) target = $region40
      $region39: #{tpu_custom_call.1} parent=5 // pred_region
        // Predicated region
        $region41: #{tpu_custom_call.1} parent=39 // pred_check
          %p233 = pneg %p38
        $region42: #{tpu_custom_call.1} parent=39 // pred_check_branch
          %235 = sbr.rel (%p233) target = $region44
        $region43: #{tpu_custom_call.1} parent=39 // pred_region
          %s236 = sand.u32 %s28, 1
          %s237 = sand.u32 %s28, 1
          %s238 = smul.addr %s237, 64
          %s239 = scalar_lea.vmem [#allocation3], %s238
          %s240 = smul.u32 4, %s18
          %s241 = smul.addr %s240, 8
          %s242 = scalar_lea.vmem %s0, %s241
          // Predicated region
          $region45: #{tpu_custom_call.1} parent=43 // pred_check
            _
          $region46: #{tpu_custom_call.1} parent=43 // pred_check_branch
            %244 = sbr.rel (0) target = $region48
          $region47: #{tpu_custom_call.1} parent=43 // pred_region
            // Predicated region
            $region49: #{tpu_custom_call.1} parent=47 // pred_check
              _
            $region50: #{tpu_custom_call.1} parent=47 // pred_check_branch
              %246 = sbr.rel (0) target = $region52
            $region51: #{tpu_custom_call.1} parent=47 // pred_region
              loop: start=0, step=1, limit=1
              $region53: #{tpu_custom_call.1} parent=51 // loop_pre_header
                _
              $region54: #{tpu_custom_call.1} parent=51 // loop_header
                %s248 = sphi 0, %s252
                %p249 = scmp.ge.s32.totalorder %s248, 1
                %s253 = sphi %s242, %s242
                %s254 = sphi %s239, %s239
              $region55: #{tpu_custom_call.1} parent=51 // loop_header_branch
                %251 = sbr.rel (%p249) target = $region59
              $region56: #{tpu_custom_call.1} parent=51 // loop_body
                %v255 = vld [vmem:[%s253] sm:$0xff]
                %256 = vst [vmem:[%s254] sm:$0xff] %v255
                %v257 = vld [vmem:[%s253 + $0x8] sm:$0xff]
                %258 = vst [vmem:[%s254 + $0x8] sm:$0xff] %v257
                %v259 = vld [vmem:[%s253 + $0x10] sm:$0xff]
                %260 = vst [vmem:[%s254 + $0x10] sm:$0xff] %v259
                %v261 = vld [vmem:[%s253 + $0x18] sm:$0xff]
                %262 = vst [vmem:[%s254 + $0x18] sm:$0xff] %v261
                %v263 = vld [vmem:[%s253 + $0x40] sm:$0xff]
                %264 = vst [vmem:[%s254 + $0x20] sm:$0xff] %v263
                %v265 = vld [vmem:[%s253 + $0x48] sm:$0xff]
                %266 = vst [vmem:[%s254 + $0x28] sm:$0xff] %v265
                %v267 = vld [vmem:[%s253 + $0x50] sm:$0xff]
                %268 = vst [vmem:[%s254 + $0x30] sm:$0xff] %v267
                %v269 = vld [vmem:[%s253 + $0x58] sm:$0xff]
                %270 = vst [vmem:[%s254 + $0x38] sm:$0xff] %v269
              $region57: #{tpu_custom_call.1} parent=51 // loop_footer
                %s252 = sadd.s32 1, %s248
              $region58: #{tpu_custom_call.1} parent=51 // loop_footer_branch
                %247 = sbr.rel target = $region54
              $region59: #{tpu_custom_call.1} parent=51 // loop_exit
                _
            $region52: #{tpu_custom_call.1} parent=47 // pred_fallthru
              _
            // Predicated region
            $region60: #{tpu_custom_call.1} parent=47 // pred_check
              _
            $region61: #{tpu_custom_call.1} parent=47 // pred_check_branch
              %272 = sbr.rel target = $region63
            $region62: #{tpu_custom_call.1} parent=47 // pred_region
              _
            $region63: #{tpu_custom_call.1} parent=47 // pred_fallthru
              _
          $region48: #{tpu_custom_call.1} parent=43 // pred_fallthru
            _
          %273 = vnop
        $region44: #{tpu_custom_call.1} parent=39 // pred_fallthru
          _
      $region40: #{tpu_custom_call.1} parent=5 // pred_fallthru
        _
      %p274 = scmp.le.s32.totalorder 1, %s18
      %p275 = scmp.lt.s32.totalorder %s18, 3
      %p276 = pnand %p274, %p275
      %p277 = pneg %p276
      // Predicated region
      $region64: #{tpu_custom_call.1} parent=5 // pred_check
        _
      $region65: #{tpu_custom_call.1} parent=5 // pred_check_branch
        %279 = sbr.rel (%p276) target = $region67
      $region66: #{tpu_custom_call.1} parent=5 // pred_region
        %s280 = ssub.s32 %s18, 1
        %s281 = sand.u32 %s31, 1
        %s282 = sand.u32 %s31, 1
        %s283 = smul.addr %s282, 64
        %s284 = scalar_lea.vmem [#allocation3], %s283
        // Predicated region
        $region68: #{tpu_custom_call.1} parent=66 // pred_check
          %p285 = pneg %p44
        $region69: #{tpu_custom_call.1} parent=66 // pred_check_branch
          %287 = sbr.rel (%p285) target = $region71
        $region70: #{tpu_custom_call.1} parent=66 // pred_region
          _
        $region71: #{tpu_custom_call.1} parent=66 // pred_fallthru
          _
        %s288 = sand.u32 %s31, 1
        %s289 = sand.u32 %s31, 1
        %s290 = smul.addr %s289, 64
        %s291 = scalar_lea.vmem [#allocation3], %s290
        %p292 = pneg %p44
        %p293 = pneg %p41
        %p294 = pneg %p65
        %p295 = pneg %p62
        %p296 = pneg %p86
        %p297 = pneg %p83
        %p298 = pneg %p107
        %p299 = pneg %p104
        %p300 = pneg %p128
        %p301 = pneg %p125
        %p302 = pneg %p149
        %p303 = pneg %p146
        %p304 = pneg %p170
        %p305 = pneg %p167
        %p306 = pneg %p196
        %p307 = pneg %p193
        %s308 = sand.u32 %s183, 1
        %s309 = scalar_lea.sflag [#allocation5], %s308
        %s310 = sand.u32 %s183, 1
        %s311 = smul.addr %s310, 4
        %s312 = scalar_lea.vmem [#allocation4], %s311
        %s313 = smul.u32 4, %s23
        %s314 = smul.u32 4, %s23
        %v315 = vld [vmem:[%s284] sm:$0xff]
        %v316 = vld [vmem:[%s284 + $0x8] sm:$0xff]
        %v317 = vld [vmem:[%s284 + $0x10] sm:$0xff]
        %v318 = vld [vmem:[%s284 + $0x18] sm:$0xff]
        %v319 = vld [vmem:[%s284 + $0x20] sm:$0xff]
        %v320 = vld [vmem:[%s284 + $0x28] sm:$0xff]
        %v321 = vld [vmem:[%s284 + $0x30] sm:$0xff]
        %v322 = vld [vmem:[%s284 + $0x38] sm:$0xff]
        %v323 = vld [vmem:[%s1] sm:$0xff]
        %v324 = vld [vmem:[%s1 + $0x8] sm:$0xff]
        %v325 = vld [vmem:[%s1 + $0x10] sm:$0xff]
        %v326 = vld [vmem:[%s1 + $0x18] sm:$0xff]
        %v327 = vld [vmem:[%s1 + $0x20] sm:$0xff]
        %v328 = vld [vmem:[%s1 + $0x28] sm:$0xff]
        %v329 = vld [vmem:[%s1 + $0x30] sm:$0xff]
        %v330 = vld [vmem:[%s1 + $0x38] sm:$0xff]
        %v331 = vld [vmem:[%s2] sm:$0xff]
        %v332 = vld [vmem:[%s2 + $0x8] sm:$0xff]
        %v333 = vld [vmem:[%s2 + $0x10] sm:$0xff]
        %v334 = vld [vmem:[%s2 + $0x18] sm:$0xff]
        %v335 = vld [vmem:[%s2 + $0x20] sm:$0xff]
        %v336 = vld [vmem:[%s2 + $0x28] sm:$0xff]
        %v337 = vld [vmem:[%s2 + $0x30] sm:$0xff]
        %v338 = vld [vmem:[%s2 + $0x38] sm:$0xff]
        %340 = vset.pattern.permute.xlu0 0
        %341 = vperm.xlu0 %340, %v331
        %v342 = vpop.permute.xlu0 %341
        %345 = vset.pattern.permute.xlu0 0
        %346 = vperm.xlu0 %345, %v332
        %v347 = vpop.permute.xlu0 %346
        %350 = vset.pattern.permute.xlu0 0
        %351 = vperm.xlu0 %350, %v333
        %v352 = vpop.permute.xlu0 %351
        %355 = vset.pattern.permute.xlu0 0
        %356 = vperm.xlu0 %355, %v334
        %v357 = vpop.permute.xlu0 %356
        %360 = vset.pattern.permute.xlu0 0
        %361 = vperm.xlu0 %360, %v335
        %v362 = vpop.permute.xlu0 %361
        %365 = vset.pattern.permute.xlu0 0
        %366 = vperm.xlu0 %365, %v336
        %v367 = vpop.permute.xlu0 %366
        %370 = vset.pattern.permute.xlu0 0
        %371 = vperm.xlu0 %370, %v337
        %v372 = vpop.permute.xlu0 %371
        %375 = vset.pattern.permute.xlu0 0
        %376 = vperm.xlu0 %375, %v338
        %v377 = vpop.permute.xlu0 %376
        %vm379 = vcmask 130048
        %v381 = vsel %vm379, %v323, 0
        %v384 = vsel %vm379, %v324, 0
        %v387 = vsel %vm379, %v325, 0
        %v390 = vsel %vm379, %v326, 0
        %v393 = vsel %vm379, %v327, 0
        %v396 = vsel %vm379, %v328, 0
        %v399 = vsel %vm379, %v329, 0
        %v402 = vsel %vm379, %v330, 0
        %404 = vmatpush.msra.mxu0 0.0
        %405 = vmatpush.msra.mxu0 0.0
        %406 = vmatpush.msra.mxu0 0.0
        %407 = vmatpush.msra.mxu0 0.0
        %408 = vmatpush.msra.mxu0 0.0
        %409 = vmatpush.msra.mxu0 0.0
        %410 = vmatpush.msra.mxu0 0.0
        %411 = vmatpush.msra.mxu0 0.0
        %412 = vmatpush.msra.mxu0 0.0
        %413 = vmatpush.msra.mxu0 0.0
        %414 = vmatpush.msra.mxu0 0.0
        %415 = vmatpush.msra.mxu0 0.0
        %416 = vmatpush.msra.mxu0 0.0
        %417 = vmatpush.msra.mxu0 0.0
        %418 = vmatpush.msra.mxu0 %v319
        %419 = vmatpush.msra.mxu0 %v315
        %420 = vmatmul.f32.gmra.mxu0 %v381
        %v421 = vpop.f32.mrf.mxu0
        %v422 = vadd.f32 %v342, %v421
        %423 = vmatmul.f32.gmra.mxu0 %v384
        %v424 = vpop.f32.mrf.mxu0
        %v425 = vadd.f32 %v347, %v424
        %426 = vmatmul.f32.gmra.mxu0 %v387
        %v427 = vpop.f32.mrf.mxu0
        %v428 = vadd.f32 %v352, %v427
        %429 = vmatmul.f32.gmra.mxu0 %v390
        %v430 = vpop.f32.mrf.mxu0
        %v431 = vadd.f32 %v357, %v430
        %432 = vmatmul.f32.gmra.mxu0 %v393
        %v433 = vpop.f32.mrf.mxu0
        %v434 = vadd.f32 %v362, %v433
        %435 = vmatmul.f32.gmra.mxu0 %v396
        %v436 = vpop.f32.mrf.mxu0
        %v437 = vadd.f32 %v367, %v436
        %438 = vmatmul.f32.gmra.mxu0 %v399
        %v439 = vpop.f32.mrf.mxu0
        %v440 = vadd.f32 %v372, %v439
        %441 = vmatmul.f32.gmra.mxu0 %v402
        %v442 = vpop.f32.mrf.mxu0
        %v443 = vadd.f32 %v377, %v442
        %444 = vdwg.mxu0
        %445 = vmatpush.msra.mxu0 0.0
        %446 = vmatpush.msra.mxu0 0.0
        %447 = vmatpush.msra.mxu0 0.0
        %448 = vmatpush.msra.mxu0 0.0
        %449 = vmatpush.msra.mxu0 0.0
        %450 = vmatpush.msra.mxu0 0.0
        %451 = vmatpush.msra.mxu0 0.0
        %452 = vmatpush.msra.mxu0 0.0
        %453 = vmatpush.msra.mxu0 0.0
        %454 = vmatpush.msra.mxu0 0.0
        %455 = vmatpush.msra.mxu0 0.0
        %456 = vmatpush.msra.mxu0 0.0
        %457 = vmatpush.msra.mxu0 0.0
        %458 = vmatpush.msra.mxu0 0.0
        %459 = vmatpush.msra.mxu0 %v320
        %460 = vmatpush.msra.mxu0 %v316
        %461 = vmatmul.f32.gmra.mxu0 %v381
        %v462 = vpop.f32.mrf.mxu0
        %v463 = vadd.f32 %v342, %v462
        %464 = vmatmul.f32.gmra.mxu0 %v384
        %v465 = vpop.f32.mrf.mxu0
        %v466 = vadd.f32 %v347, %v465
        %467 = vmatmul.f32.gmra.mxu0 %v387
        %v468 = vpop.f32.mrf.mxu0
        %v469 = vadd.f32 %v352, %v468
        %470 = vmatmul.f32.gmra.mxu0 %v390
        %v471 = vpop.f32.mrf.mxu0
        %v472 = vadd.f32 %v357, %v471
        %473 = vmatmul.f32.gmra.mxu0 %v393
        %v474 = vpop.f32.mrf.mxu0
        %v475 = vadd.f32 %v362, %v474
        %476 = vmatmul.f32.gmra.mxu0 %v396
        %v477 = vpop.f32.mrf.mxu0
        %v478 = vadd.f32 %v367, %v477
        %479 = vmatmul.f32.gmra.mxu0 %v399
        %v480 = vpop.f32.mrf.mxu0
        %v481 = vadd.f32 %v372, %v480
        %482 = vmatmul.f32.gmra.mxu0 %v402
        %v483 = vpop.f32.mrf.mxu0
        %v484 = vadd.f32 %v377, %v483
        %485 = vdwg.mxu0
        %486 = vmatpush.msra.mxu0 0.0
        %487 = vmatpush.msra.mxu0 0.0
        %488 = vmatpush.msra.mxu0 0.0
        %489 = vmatpush.msra.mxu0 0.0
        %490 = vmatpush.msra.mxu0 0.0
        %491 = vmatpush.msra.mxu0 0.0
        %492 = vmatpush.msra.mxu0 0.0
        %493 = vmatpush.msra.mxu0 0.0
        %494 = vmatpush.msra.mxu0 0.0
        %495 = vmatpush.msra.mxu0 0.0
        %496 = vmatpush.msra.mxu0 0.0
        %497 = vmatpush.msra.mxu0 0.0
        %498 = vmatpush.msra.mxu0 0.0
        %499 = vmatpush.msra.mxu0 0.0
        %500 = vmatpush.msra.mxu0 %v321
        %501 = vmatpush.msra.mxu0 %v317
        %502 = vmatmul.f32.gmra.mxu0 %v381
        %v503 = vpop.f32.mrf.mxu0
        %v504 = vadd.f32 %v342, %v503
        %505 = vmatmul.f32.gmra.mxu0 %v384
        %v506 = vpop.f32.mrf.mxu0
        %v507 = vadd.f32 %v347, %v506
        %508 = vmatmul.f32.gmra.mxu0 %v387
        %v509 = vpop.f32.mrf.mxu0
        %v510 = vadd.f32 %v352, %v509
        %511 = vmatmul.f32.gmra.mxu0 %v390
        %v512 = vpop.f32.mrf.mxu0
        %v513 = vadd.f32 %v357, %v512
        %514 = vmatmul.f32.gmra.mxu0 %v393
        %v515 = vpop.f32.mrf.mxu0
        %v516 = vadd.f32 %v362, %v515
        %517 = vmatmul.f32.gmra.mxu0 %v396
        %v518 = vpop.f32.mrf.mxu0
        %v519 = vadd.f32 %v367, %v518
        %520 = vmatmul.f32.gmra.mxu0 %v399
        %v521 = vpop.f32.mrf.mxu0
        %v522 = vadd.f32 %v372, %v521
        %523 = vmatmul.f32.gmra.mxu0 %v402
        %v524 = vpop.f32.mrf.mxu0
        %v525 = vadd.f32 %v377, %v524
        %526 = vdwg.mxu0
        %527 = vmatpush.msra.mxu0 0.0
        %528 = vmatpush.msra.mxu0 0.0
        %529 = vmatpush.msra.mxu0 0.0
        %530 = vmatpush.msra.mxu0 0.0
        %531 = vmatpush.msra.mxu0 0.0
        %532 = vmatpush.msra.mxu0 0.0
        %533 = vmatpush.msra.mxu0 0.0
        %534 = vmatpush.msra.mxu0 0.0
        %535 = vmatpush.msra.mxu0 0.0
        %536 = vmatpush.msra.mxu0 0.0
        %537 = vmatpush.msra.mxu0 0.0
        %538 = vmatpush.msra.mxu0 0.0
        %539 = vmatpush.msra.mxu0 0.0
        %540 = vmatpush.msra.mxu0 0.0
        %541 = vmatpush.msra.mxu0 %v322
        %542 = vmatpush.msra.mxu0 %v318
        %543 = vmatmul.f32.gmra.mxu0 %v381
        %v544 = vpop.f32.mrf.mxu0
        %v545 = vadd.f32 %v342, %v544
        %546 = vmatmul.f32.gmra.mxu0 %v384
        %v547 = vpop.f32.mrf.mxu0
        %v548 = vadd.f32 %v347, %v547
        %549 = vmatmul.f32.gmra.mxu0 %v387
        %v550 = vpop.f32.mrf.mxu0
        %v551 = vadd.f32 %v352, %v550
        %552 = vmatmul.f32.gmra.mxu0 %v390
        %v553 = vpop.f32.mrf.mxu0
        %v554 = vadd.f32 %v357, %v553
        %555 = vmatmul.f32.gmra.mxu0 %v393
        %v556 = vpop.f32.mrf.mxu0
        %v557 = vadd.f32 %v362, %v556
        %558 = vmatmul.f32.gmra.mxu0 %v396
        %v559 = vpop.f32.mrf.mxu0
        %v560 = vadd.f32 %v367, %v559
        %561 = vmatmul.f32.gmra.mxu0 %v399
        %v562 = vpop.f32.mrf.mxu0
        %v563 = vadd.f32 %v372, %v562
        %564 = vmatmul.f32.gmra.mxu0 %v402
        %v565 = vpop.f32.mrf.mxu0
        %v566 = vadd.f32 %v377, %v565
        %567 = vdwg.mxu0
        %v568 = vtanh.pop %v422
        %v569 = vtanh.pop %v463
        %v570 = vtanh.pop %v504
        %v571 = vtanh.pop %v545
        %v572 = vtanh.pop %v425
        %v573 = vtanh.pop %v466
        %v574 = vtanh.pop %v507
        %v575 = vtanh.pop %v548
        %v576 = vtanh.pop %v428
        %v577 = vtanh.pop %v469
        %v578 = vtanh.pop %v510
        %v579 = vtanh.pop %v551
        %v580 = vtanh.pop %v431
        %v581 = vtanh.pop %v472
        %v582 = vtanh.pop %v513
        %v583 = vtanh.pop %v554
        %v584 = vtanh.pop %v434
        %v585 = vtanh.pop %v475
        %v586 = vtanh.pop %v516
        %v587 = vtanh.pop %v557
        %v588 = vtanh.pop %v437
        %v589 = vtanh.pop %v478
        %v590 = vtanh.pop %v519
        %v591 = vtanh.pop %v560
        %v592 = vtanh.pop %v440
        %v593 = vtanh.pop %v481
        %v594 = vtanh.pop %v522
        %v595 = vtanh.pop %v563
        %v596 = vtanh.pop %v443
        %v597 = vtanh.pop %v484
        %v598 = vtanh.pop %v525
        %v599 = vtanh.pop %v566
        %v600 = vld [vmem:[%s3] sm:$0xff]
        %v601 = vld [vmem:[%s3 + $0x8] sm:$0xff]
        %v602 = vld [vmem:[%s3 + $0x10] sm:$0xff]
        %v603 = vld [vmem:[%s3 + $0x18] sm:$0xff]
        %v604 = vld [vmem:[%s3 + $0x20] sm:$0xff]
        %v605 = vld [vmem:[%s3 + $0x28] sm:$0xff]
        %v606 = vld [vmem:[%s3 + $0x30] sm:$0xff]
        %v607 = vld [vmem:[%s3 + $0x38] sm:$0xff]
        %v608 = vld [vmem:[%s4] sm:$0xff]
        %v609 = vld [vmem:[%s4 + $0x8] sm:$0xff]
        %v610 = vld [vmem:[%s4 + $0x10] sm:$0xff]
        %v611 = vld [vmem:[%s4 + $0x18] sm:$0xff]
        %v612 = vld [vmem:[%s4 + $0x20] sm:$0xff]
        %v613 = vld [vmem:[%s4 + $0x28] sm:$0xff]
        %v614 = vld [vmem:[%s4 + $0x30] sm:$0xff]
        %v615 = vld [vmem:[%s4 + $0x38] sm:$0xff]
        %617 = vset.pattern.permute.xlu0 0
        %618 = vperm.xlu0 %617, %v608
        %v619 = vpop.permute.xlu0 %618
        %622 = vset.pattern.permute.xlu0 0
        %623 = vperm.xlu0 %622, %v609
        %v624 = vpop.permute.xlu0 %623
        %627 = vset.pattern.permute.xlu0 0
        %628 = vperm.xlu0 %627, %v610
        %v629 = vpop.permute.xlu0 %628
        %632 = vset.pattern.permute.xlu0 0
        %633 = vperm.xlu0 %632, %v611
        %v634 = vpop.permute.xlu0 %633
        %637 = vset.pattern.permute.xlu0 0
        %638 = vperm.xlu0 %637, %v612
        %v639 = vpop.permute.xlu0 %638
        %642 = vset.pattern.permute.xlu0 0
        %643 = vperm.xlu0 %642, %v613
        %v644 = vpop.permute.xlu0 %643
        %647 = vset.pattern.permute.xlu0 0
        %648 = vperm.xlu0 %647, %v614
        %v649 = vpop.permute.xlu0 %648
        %652 = vset.pattern.permute.xlu0 0
        %653 = vperm.xlu0 %652, %v615
        %v654 = vpop.permute.xlu0 %653
        %vm656 = vcmask 523264
        %v658 = vsel %vm656, %v600, 0
        %v661 = vsel %vm656, %v601, 0
        %v664 = vsel %vm656, %v602, 0
        %v667 = vsel %vm656, %v603, 0
        %v670 = vsel %vm656, %v604, 0
        %v673 = vsel %vm656, %v605, 0
        %v676 = vsel %vm656, %v606, 0
        %v679 = vsel %vm656, %v607, 0
        %681 = vmatpush.msra.mxu0 0.0
        %682 = vmatpush.msra.mxu0 0.0
        %683 = vmatpush.msra.mxu0 0.0
        %684 = vmatpush.msra.mxu0 0.0
        %685 = vmatpush.msra.mxu0 0.0
        %686 = vmatpush.msra.mxu0 0.0
        %687 = vmatpush.msra.mxu0 0.0
        %688 = vmatpush.msra.mxu0 0.0
        %689 = vmatpush.msra.mxu0 %v596
        %690 = vmatpush.msra.mxu0 %v592
        %691 = vmatpush.msra.mxu0 %v588
        %692 = vmatpush.msra.mxu0 %v584
        %693 = vmatpush.msra.mxu0 %v580
        %694 = vmatpush.msra.mxu0 %v576
        %695 = vmatpush.msra.mxu0 %v572
        %696 = vmatpush.msra.mxu0 %v568
        %697 = vmatmul.f32.gmra.mxu0 %v658
        %v698 = vpop.f32.mrf.mxu0
        %v699 = vadd.f32 %v619, %v698
        %700 = vmatmul.f32.gmra.mxu0 %v661
        %v701 = vpop.f32.mrf.mxu0
        %v702 = vadd.f32 %v624, %v701
        %703 = vmatmul.f32.gmra.mxu0 %v664
        %v704 = vpop.f32.mrf.mxu0
        %v705 = vadd.f32 %v629, %v704
        %706 = vmatmul.f32.gmra.mxu0 %v667
        %v707 = vpop.f32.mrf.mxu0
        %v708 = vadd.f32 %v634, %v707
        %709 = vmatmul.f32.gmra.mxu0 %v670
        %v710 = vpop.f32.mrf.mxu0
        %v711 = vadd.f32 %v639, %v710
        %712 = vmatmul.f32.gmra.mxu0 %v673
        %v713 = vpop.f32.mrf.mxu0
        %v714 = vadd.f32 %v644, %v713
        %715 = vmatmul.f32.gmra.mxu0 %v676
        %v716 = vpop.f32.mrf.mxu0
        %v717 = vadd.f32 %v649, %v716
        %718 = vmatmul.f32.gmra.mxu0 %v679
        %v719 = vpop.f32.mrf.mxu0
        %v720 = vadd.f32 %v654, %v719
        %721 = vdwg.mxu0
        %722 = vmatpush.msra.mxu0 0.0
        %723 = vmatpush.msra.mxu0 0.0
        %724 = vmatpush.msra.mxu0 0.0
        %725 = vmatpush.msra.mxu0 0.0
        %726 = vmatpush.msra.mxu0 0.0
        %727 = vmatpush.msra.mxu0 0.0
        %728 = vmatpush.msra.mxu0 0.0
        %729 = vmatpush.msra.mxu0 0.0
        %730 = vmatpush.msra.mxu0 %v597
        %731 = vmatpush.msra.mxu0 %v593
        %732 = vmatpush.msra.mxu0 %v589
        %733 = vmatpush.msra.mxu0 %v585
        %734 = vmatpush.msra.mxu0 %v581
        %735 = vmatpush.msra.mxu0 %v577
        %736 = vmatpush.msra.mxu0 %v573
        %737 = vmatpush.msra.mxu0 %v569
        %738 = vmatmul.f32.gmra.mxu0 %v658
        %v739 = vpop.f32.mrf.mxu0
        %v740 = vadd.f32 %v619, %v739
        %741 = vmatmul.f32.gmra.mxu0 %v661
        %v742 = vpop.f32.mrf.mxu0
        %v743 = vadd.f32 %v624, %v742
        %744 = vmatmul.f32.gmra.mxu0 %v664
        %v745 = vpop.f32.mrf.mxu0
        %v746 = vadd.f32 %v629, %v745
        %747 = vmatmul.f32.gmra.mxu0 %v667
        %v748 = vpop.f32.mrf.mxu0
        %v749 = vadd.f32 %v634, %v748
        %750 = vmatmul.f32.gmra.mxu0 %v670
        %v751 = vpop.f32.mrf.mxu0
        %v752 = vadd.f32 %v639, %v751
        %753 = vmatmul.f32.gmra.mxu0 %v673
        %v754 = vpop.f32.mrf.mxu0
        %v755 = vadd.f32 %v644, %v754
        %756 = vmatmul.f32.gmra.mxu0 %v676
        %v757 = vpop.f32.mrf.mxu0
        %v758 = vadd.f32 %v649, %v757
        %759 = vmatmul.f32.gmra.mxu0 %v679
        %v760 = vpop.f32.mrf.mxu0
        %v761 = vadd.f32 %v654, %v760
        %762 = vdwg.mxu0
        %763 = vmatpush.msra.mxu0 0.0
        %764 = vmatpush.msra.mxu0 0.0
        %765 = vmatpush.msra.mxu0 0.0
        %766 = vmatpush.msra.mxu0 0.0
        %767 = vmatpush.msra.mxu0 0.0
        %768 = vmatpush.msra.mxu0 0.0
        %769 = vmatpush.msra.mxu0 0.0
        %770 = vmatpush.msra.mxu0 0.0
        %771 = vmatpush.msra.mxu0 %v598
        %772 = vmatpush.msra.mxu0 %v594
        %773 = vmatpush.msra.mxu0 %v590
        %774 = vmatpush.msra.mxu0 %v586
        %775 = vmatpush.msra.mxu0 %v582
        %776 = vmatpush.msra.mxu0 %v578
        %777 = vmatpush.msra.mxu0 %v574
        %778 = vmatpush.msra.mxu0 %v570
        %779 = vmatmul.f32.gmra.mxu0 %v658
        %v780 = vpop.f32.mrf.mxu0
        %v781 = vadd.f32 %v619, %v780
        %782 = vmatmul.f32.gmra.mxu0 %v661
        %v783 = vpop.f32.mrf.mxu0
        %v784 = vadd.f32 %v624, %v783
        %785 = vmatmul.f32.gmra.mxu0 %v664
        %v786 = vpop.f32.mrf.mxu0
        %v787 = vadd.f32 %v629, %v786
        %788 = vmatmul.f32.gmra.mxu0 %v667
        %v789 = vpop.f32.mrf.mxu0
        %v790 = vadd.f32 %v634, %v789
        %791 = vmatmul.f32.gmra.mxu0 %v670
        %v792 = vpop.f32.mrf.mxu0
        %v793 = vadd.f32 %v639, %v792
        %794 = vmatmul.f32.gmra.mxu0 %v673
        %v795 = vpop.f32.mrf.mxu0
        %v796 = vadd.f32 %v644, %v795
        %797 = vmatmul.f32.gmra.mxu0 %v676
        %v798 = vpop.f32.mrf.mxu0
        %v799 = vadd.f32 %v649, %v798
        %800 = vmatmul.f32.gmra.mxu0 %v679
        %v801 = vpop.f32.mrf.mxu0
        %v802 = vadd.f32 %v654, %v801
        %803 = vdwg.mxu0
        %804 = vmatpush.msra.mxu0 0.0
        %805 = vmatpush.msra.mxu0 0.0
        %806 = vmatpush.msra.mxu0 0.0
        %807 = vmatpush.msra.mxu0 0.0
        %808 = vmatpush.msra.mxu0 0.0
        %809 = vmatpush.msra.mxu0 0.0
        %810 = vmatpush.msra.mxu0 0.0
        %811 = vmatpush.msra.mxu0 0.0
        %812 = vmatpush.msra.mxu0 %v599
        %813 = vmatpush.msra.mxu0 %v595
        %814 = vmatpush.msra.mxu0 %v591
        %815 = vmatpush.msra.mxu0 %v587
        %816 = vmatpush.msra.mxu0 %v583
        %817 = vmatpush.msra.mxu0 %v579
        %818 = vmatpush.msra.mxu0 %v575
        %819 = vmatpush.msra.mxu0 %v571
        %820 = vmatmul.f32.gmra.mxu0 %v658
        %v821 = vpop.f32.mrf.mxu0
        %v822 = vadd.f32 %v619, %v821
        %823 = vmatmul.f32.gmra.mxu0 %v661
        %v824 = vpop.f32.mrf.mxu0
        %v825 = vadd.f32 %v624, %v824
        %826 = vmatmul.f32.gmra.mxu0 %v664
        %v827 = vpop.f32.mrf.mxu0
        %v828 = vadd.f32 %v629, %v827
        %829 = vmatmul.f32.gmra.mxu0 %v667
        %v830 = vpop.f32.mrf.mxu0
        %v831 = vadd.f32 %v634, %v830
        %832 = vmatmul.f32.gmra.mxu0 %v670
        %v833 = vpop.f32.mrf.mxu0
        %v834 = vadd.f32 %v639, %v833
        %835 = vmatmul.f32.gmra.mxu0 %v673
        %v836 = vpop.f32.mrf.mxu0
        %v837 = vadd.f32 %v644, %v836
        %838 = vmatmul.f32.gmra.mxu0 %v676
        %v839 = vpop.f32.mrf.mxu0
        %v840 = vadd.f32 %v649, %v839
        %841 = vmatmul.f32.gmra.mxu0 %v679
        %v842 = vpop.f32.mrf.mxu0
        %v843 = vadd.f32 %v654, %v842
        %844 = vdwg.mxu0
        %v845 = vtanh.pop %v699
        %v846 = vtanh.pop %v740
        %v847 = vtanh.pop %v781
        %v848 = vtanh.pop %v822
        %v849 = vtanh.pop %v702
        %v850 = vtanh.pop %v743
        %v851 = vtanh.pop %v784
        %v852 = vtanh.pop %v825
        %v853 = vtanh.pop %v705
        %v854 = vtanh.pop %v746
        %v855 = vtanh.pop %v787
        %v856 = vtanh.pop %v828
        %v857 = vtanh.pop %v708
        %v858 = vtanh.pop %v749
        %v859 = vtanh.pop %v790
        %v860 = vtanh.pop %v831
        %v861 = vtanh.pop %v711
        %v862 = vtanh.pop %v752
        %v863 = vtanh.pop %v793
        %v864 = vtanh.pop %v834
        %v865 = vtanh.pop %v714
        %v866 = vtanh.pop %v755
        %v867 = vtanh.pop %v796
        %v868 = vtanh.pop %v837
        %v869 = vtanh.pop %v717
        %v870 = vtanh.pop %v758
        %v871 = vtanh.pop %v799
        %v872 = vtanh.pop %v840
        %v873 = vtanh.pop %v720
        %v874 = vtanh.pop %v761
        %v875 = vtanh.pop %v802
        %v876 = vtanh.pop %v843
        %v877 = vld [vmem:[%s5] sm:$0xff]
        %v878 = vld [vmem:[%s5 + $0x8] sm:$0xff]
        %v879 = vld [vmem:[%s5 + $0x10] sm:$0xff]
        %v880 = vld [vmem:[%s5 + $0x18] sm:$0xff]
        %v881 = vld [vmem:[%s5 + $0x20] sm:$0xff]
        %v882 = vld [vmem:[%s5 + $0x28] sm:$0xff]
        %v883 = vld [vmem:[%s5 + $0x30] sm:$0xff]
        %v884 = vld [vmem:[%s5 + $0x38] sm:$0xff]
        %886 = vset.pattern.permute.xlu0 0
        %887 = vperm.xlu0 %886, %v877
        %v888 = vpop.permute.xlu0 %887
        %891 = vset.pattern.permute.xlu0 0
        %892 = vperm.xlu0 %891, %v878
        %v893 = vpop.permute.xlu0 %892
        %896 = vset.pattern.permute.xlu0 0
        %897 = vperm.xlu0 %896, %v879
        %v898 = vpop.permute.xlu0 %897
        %901 = vset.pattern.permute.xlu0 0
        %902 = vperm.xlu0 %901, %v880
        %v903 = vpop.permute.xlu0 %902
        %906 = vset.pattern.permute.xlu0 0
        %907 = vperm.xlu0 %906, %v881
        %v908 = vpop.permute.xlu0 %907
        %911 = vset.pattern.permute.xlu0 0
        %912 = vperm.xlu0 %911, %v882
        %v913 = vpop.permute.xlu0 %912
        %916 = vset.pattern.permute.xlu0 0
        %917 = vperm.xlu0 %916, %v883
        %v918 = vpop.permute.xlu0 %917
        %921 = vset.pattern.permute.xlu0 0
        %922 = vperm.xlu0 %921, %v884
        %v923 = vpop.permute.xlu0 %922
        %v925 = vmul.f32 %v845, %v888
        %v926 = vmul.f32 %v846, %v888
        %v927 = vmul.f32 %v847, %v888
        %v928 = vmul.f32 %v848, %v888
        %v929 = vmul.f32 %v849, %v893
        %v930 = vmul.f32 %v850, %v893
        %v931 = vmul.f32 %v851, %v893
        %v932 = vmul.f32 %v852, %v893
        %v933 = vmul.f32 %v853, %v898
        %v934 = vmul.f32 %v854, %v898
        %v935 = vmul.f32 %v855, %v898
        %v936 = vmul.f32 %v856, %v898
        %v937 = vmul.f32 %v857, %v903
        %v938 = vmul.f32 %v858, %v903
        %v939 = vmul.f32 %v859, %v903
        %v940 = vmul.f32 %v860, %v903
        %v941 = vmul.f32 %v861, %v908
        %v942 = vmul.f32 %v862, %v908
        %v943 = vmul.f32 %v863, %v908
        %v944 = vmul.f32 %v864, %v908
        %v945 = vmul.f32 %v865, %v913
        %v946 = vmul.f32 %v866, %v913
        %v947 = vmul.f32 %v867, %v913
        %v948 = vmul.f32 %v868, %v913
        %v949 = vmul.f32 %v869, %v918
        %v950 = vmul.f32 %v870, %v918
        %v951 = vmul.f32 %v871, %v918
        %v952 = vmul.f32 %v872, %v918
        %v953 = vmul.f32 %v873, %v923
        %v954 = vmul.f32 %v874, %v923
        %v955 = vmul.f32 %v875, %v923
        %v956 = vmul.f32 %v876, %v923
        %v957 = vadd.f32 %v925, %v929
        %v958 = vadd.f32 %v957, %v933
        %v959 = vadd.f32 %v958, %v937
        %v960 = vadd.f32 %v959, %v941
        %v961 = vadd.f32 %v960, %v945
        %v962 = vadd.f32 %v961, %v949
        %v963 = vadd.f32 %v962, %v953
        %v964 = vrot.slane %v963, 4
        %v965 = vadd.f32 %v963, %v964
        %v966 = vrot.slane %v965, 2
        %v967 = vadd.f32 %v965, %v966
        %v968 = vrot.slane %v967, 1
        %v969 = vadd.f32 %v967, %v968
        %v970 = vadd.f32 %v926, %v930
        %v971 = vadd.f32 %v970, %v934
        %v972 = vadd.f32 %v971, %v938
        %v973 = vadd.f32 %v972, %v942
        %v974 = vadd.f32 %v973, %v946
        %v975 = vadd.f32 %v974, %v950
        %v976 = vadd.f32 %v975, %v954
        %v977 = vrot.slane %v976, 4
        %v978 = vadd.f32 %v976, %v977
        %v979 = vrot.slane %v978, 2
        %v980 = vadd.f32 %v978, %v979
        %v981 = vrot.slane %v980, 1
        %v982 = vadd.f32 %v980, %v981
        %v983 = vadd.f32 %v927, %v931
        %v984 = vadd.f32 %v983, %v935
        %v985 = vadd.f32 %v984, %v939
        %v986 = vadd.f32 %v985, %v943
        %v987 = vadd.f32 %v986, %v947
        %v988 = vadd.f32 %v987, %v951
        %v989 = vadd.f32 %v988, %v955
        %v990 = vrot.slane %v989, 4
        %v991 = vadd.f32 %v989, %v990
        %v992 = vrot.slane %v991, 2
        %v993 = vadd.f32 %v991, %v992
        %v994 = vrot.slane %v993, 1
        %v995 = vadd.f32 %v993, %v994
        %v996 = vadd.f32 %v928, %v932
        %v997 = vadd.f32 %v996, %v936
        %v998 = vadd.f32 %v997, %v940
        %v999 = vadd.f32 %v998, %v944
        %v1000 = vadd.f32 %v999, %v948
        %v1001 = vadd.f32 %v1000, %v952
        %v1002 = vadd.f32 %v1001, %v956
        %v1003 = vrot.slane %v1002, 4
        %v1004 = vadd.f32 %v1002, %v1003
        %v1005 = vrot.slane %v1004, 2
        %v1006 = vadd.f32 %v1004, %v1005
        %v1007 = vrot.slane %v1006, 1
        %v1008 = vadd.f32 %v1006, %v1007
        %v1009 = vld [vmem:[#allocation2] sm:$0x1]
        %1011 = vset.pattern.permute.xlu0 0
        %1012 = vperm.xlu0 %1011, %v1009
        %v1013 = vpop.permute.xlu0 %1012
        %v1015 = vperm.slane %v1013, 0
        %v1016 = vadd.f32 %v969, %v1015
        %v1017 = vadd.f32 %v982, %v1015
        %v1018 = vadd.f32 %v995, %v1015
        %v1019 = vadd.f32 %v1008, %v1015
        %v1024 = vrot.slane %v1017, 7
        %v1025 = vrot.slane %v1018, 6
        %v1026 = vrot.slane %v1019, 5
        %vm1027 = vcmask 1040384
        %v1028 = vsel %vm1027, %v1016, %v1024
        %vm1029 = vcmask 1042434
        %v1030 = vsel %vm1029, %v1025, %v1026
        %vm1031 = vcmask 1041408
        %v1032 = vsel %vm1031, %v1028, %v1030
        %v1034 = vlaneseq
        %vm1035 = vcmp.ge.s32.totalorder %v1034, 0
        %vm1036 = vcmp.lt.s32.totalorder %v1034, 512
        %vm1037 = vmand %vm1035, %vm1036
        %1038 = vst.msk [vmem:[%s312] sm:$0xf] %vm1037, %v1032
        %s1039 = sand.u32 %s183, 1
        %s1040 = scalar_lea.sflag [#allocation5], %s1039
        %s1041 = sand.u32 %s183, 1
        %s1042 = smul.addr %s1041, 4
        %s1043 = scalar_lea.vmem [#allocation4], %s1042
        // Predicated region
        $region72: #{tpu_custom_call.1} parent=66 // pred_check
          %p1044 = pneg %p193
        $region73: #{tpu_custom_call.1} parent=66 // pred_check_branch
          %1046 = sbr.rel (%p1044) target = $region75
        $region74: #{tpu_custom_call.1} parent=66 // pred_region
          %s1047 = smul.u32 4, %s23
          %1049 = vsyncadd %s1040, 0
          %s1050 = scalar_lea.hbm %s7, %s1047
          %s1052 = sshll.u32 %s1043, 4
          %s1053 = int_to_ptr.vmem [resolvable:$true] %s1052
          %s1054 = sshll.u32 %s1050, 4
          %s1055 = int_to_ptr.hbm [resolvable:$true] %s1054
          %1057 = dma.vmem_to_hbm [thread:$0]  %s1053, 64, %s1055, %s1040
        $region75: #{tpu_custom_call.1} parent=66 // pred_fallthru
          _
      $region67: #{tpu_custom_call.1} parent=5 // pred_fallthru
        _
      %p1058 = scmp.le.s32.totalorder 2, %s18
      // Predicated region
      $region76: #{tpu_custom_call.1} parent=5 // pred_check
        %p1059 = pneg %p1058
      $region77: #{tpu_custom_call.1} parent=5 // pred_check_branch
        %1061 = sbr.rel (%p1059) target = $region79
      $region78: #{tpu_custom_call.1} parent=5 // pred_region
        %s1062 = ssub.s32 %s18, 2
        // Predicated region
        $region80: #{tpu_custom_call.1} parent=78 // pred_check
          %p1063 = pneg %p199
        $region81: #{tpu_custom_call.1} parent=78 // pred_check_branch
          %1065 = sbr.rel (%p1063) target = $region83
        $region82: #{tpu_custom_call.1} parent=78 // pred_region
          %s1066 = sand.u32 %s184, 1
          %s1067 = scalar_lea.sflag [#allocation5], %s1066
          %s1068 = sand.u32 %s184, 1
          %s1069 = smul.addr %s1068, 4
          %s1070 = scalar_lea.vmem [#allocation4], %s1069
          %1072 = dma.done %s1067, 64
        $region83: #{tpu_custom_call.1} parent=78 // pred_fallthru
          _
      $region79: #{tpu_custom_call.1} parent=5 // pred_fallthru
        _
    $region6: #{tpu_custom_call.1} parent=1 // loop_footer
      %s22 = sadd.s32 1, %s18
    $region7: #{tpu_custom_call.1} parent=1 // loop_footer_branch
      %17 = sbr.rel target = $region3
    $region8: #{tpu_custom_call.1} parent=1 // loop_exit
      _
    %1073 = vsyncpa [#allocation5], 1
    %s1074 = scalar_lea.sflag [#allocation5], 1
    %1075 = vsyncpa %s1074, 1

</llo_original>
